<compile_context>
chip_gen: v5e
topology: v5e:2x2
jax: 0.10.0
libtpu: 0.0.40
codegen_flags: <defaults>
</compile_context>

<pallas_src>
import functools
from typing import NamedTuple

import jax
import jax.numpy as jnp
from jax.experimental import pallas as pl
from jax.experimental.pallas import tpu as pltpu


def _round_up(n, m):
    return ((n + m - 1) // m) * m


# ----------------------------------------------------------------------------
# Kernel: fc1 + ReLU -> fc2 + ReLU -> fused heads (fc31 | fc32)
# ----------------------------------------------------------------------------
def encoder_vae_kernel(x_ref, w1_ref, b1_ref, w2_ref, b2_ref, w3_ref, b3_ref,
                       out_ref):
    # x / weights may be bf16; all MXU accumulation and all VPU work
    # (bias add, ReLU) is f32 (keeps v5e's f32-only VPU happy).
    x = x_ref[...]

    h = jnp.dot(x, w1_ref[...], preferred_element_type=jnp.float32) + b1_ref[...]
    h = jnp.maximum(h, 0.0)

    h = jnp.dot(h.astype(w2_ref.dtype), w2_ref[...],
                preferred_element_type=jnp.float32) + b2_ref[...]
    h = jnp.maximum(h, 0.0)

    # fused heads -> [tb, out_p] = (mu | log_var) side by side, lane-dense.
    out = jnp.dot(h.astype(w3_ref.dtype), w3_ref[...],
                  preferred_element_type=jnp.float32) + b3_ref[...]
    out_ref[...] = out.astype(out_ref.dtype)


class EncoderVAEMeta(NamedTuple):
    """Static (hashable) metadata, passed as a static jit argument."""
    input_dim: int
    hidden_dim: int
    latent_dim: int
    in_p: int
    h_p: int
    out_p: int
    compute_dtype: str          # dtype name so the tuple stays hashable


class EncoderVAEParams(NamedTuple):
    """Prepared (transposed / padded / head-fused / cast) device arrays."""
    w1: jax.Array
    b1: jax.Array
    w2: jax.Array
    b2: jax.Array
    w3: jax.Array
    b3: jax.Array


def prepare_params(params, *, compute_dtype=jnp.bfloat16):
    """One-time weight preprocessing.  Call once, reuse across forwards.

    params: PyTorch-convention weights:
        w1 [H, In], b1 [H], w2 [H, H], b2 [H],
        w31 [L, H], b31 [L], w32 [L, H], b32 [L]
    """
    compute_dtype = jnp.dtype(compute_dtype)
    sub = 16 if compute_dtype.itemsize == 2 else 8   # sublane pack factor

    hidden_dim, input_dim = params["w1"].shape
    latent_dim = params["w31"].shape[0]
    head_dim = 2 * latent_dim

    in_p = _round_up(input_dim, sub)      # contraction dim only: no 128 pad of x
    h_p = _round_up(hidden_dim, 128)
    out_p = _round_up(head_dim, 128)

    def pad2(a, rows, cols):
        pr, pc = rows - a.shape[0], cols - a.shape[1]
        return a if (pr == 0 and pc == 0) else jnp.pad(a, ((0, pr), (0, pc)))

    # Weights: [out, in] -> [in, out], heads fused along out dim, padded, cast.
    w1 = pad2(params["w1"].T, in_p, h_p).astype(compute_dtype)
    w2 = pad2(params["w2"].T, h_p, h_p).astype(compute_dtype)
    w3 = pad2(jnp.concatenate([params["w31"].T, params["w32"].T], axis=1),
              h_p, out_p).astype(compute_dtype)
    # Biases stay f32 (the bias add / ReLU path is f32).
    b1 = pad2(params["b1"].reshape(1, -1).astype(jnp.float32), 1, h_p)
    b2 = pad2(params["b2"].reshape(1, -1).astype(jnp.float32), 1, h_p)
    b3 = pad2(jnp.concatenate([params["b31"], params["b32"]])
              .reshape(1, -1).astype(jnp.float32), 1, out_p)

    prep = EncoderVAEParams(w1=w1, b1=b1, w2=w2, b2=b2, w3=w3, b3=b3)
    meta = EncoderVAEMeta(input_dim=input_dim, hidden_dim=hidden_dim,
                          latent_dim=latent_dim, in_p=in_p, h_p=h_p,
                          out_p=out_p, compute_dtype=compute_dtype.name)
    return prep, meta


@functools.partial(jax.jit, static_argnames=("meta", "tb"))
def encoder_vae_forward(x, prep, meta, *, tb=None):
    """Fused VAE-encoder forward.  Returns (mu, log_var), each [B, latent]."""
    compute_dtype = jnp.dtype(meta.compute_dtype)
    itemsize = compute_dtype.itemsize
    sub = 16 if itemsize == 2 else 8

    B, input_dim = x.shape
    if input_dim != meta.input_dim:
        raise ValueError(f"x feature dim {input_dim} != prepared {meta.input_dim}")

    # --- batch tile selection (all static python) ---------------------------
    b_round = _round_up(B, sub)
    if tb is None:
        if b_round >= 256:
            # >=2 grid programs so both v7x TensorCores get work; cap tiles at
            # 2048 rows, but keep them big to amortize the ~0.35us/step grid
            # overhead on single-core v5e/v6e.
            nprog = max(2, pl.cdiv(b_round, 2048))
            tb = _round_up(pl.cdiv(b_round, nprog), sub)
        else:
            tb = b_round      # single big tile; splitting tiny batches only adds overhead
    tb = _round_up(max(int(tb), sub), sub)   # validate caller-supplied tb
    b_p = _round_up(b_round, tb)
    grid = (b_p // tb,)

    # --- x: cast to compute dtype, pad batch rows / tiny feature pad --------
    xp = x if x.dtype == compute_dtype else x.astype(compute_dtype)
    pr, pc = b_p - B, meta.in_p - input_dim
    if pr or pc:
        xp = jnp.pad(xp, ((0, pr), (0, pc)))

    # --- advisory cost estimate ---------------------------------------------
    head_dim = 2 * meta.latent_dim
    flops = 2 * B * (meta.input_dim * meta.hidden_dim
                     + meta.hidden_dim * meta.hidden_dim
                     + meta.hidden_dim * head_dim)
    weight_bytes = ((prep.w1.size + prep.w2.size + prep.w3.size) * itemsize
                    + (prep.b1.size + prep.b2.size + prep.b3.size) * 4)
    bytes_accessed = int(b_p * meta.in_p * itemsize     # streamed x
                         + weight_bytes                 # resident weights
                         + b_p * meta.out_p * 4)        # fused-head output

    # --- explicit VMEM budget: single-buffered weights + double-buffered
    #     x/out streams + f32 intermediates, generous headroom, capped at
    #     v7x's 64 MiB physical VMEM.
    stream_bytes = 2 * tb * (meta.in_p * itemsize + meta.out_p * 4)
    interm_bytes = 3 * tb * meta.h_p * 4
    vmem_limit = int(min(64 * 1024 * 1024,
                         max(32 * 1024 * 1024,
                             weight_bytes + stream_bytes + interm_bytes
                             + 8 * 1024 * 1024)))

    def resident(shape):
        # Fully resident weights/biases: same block every grid step, so a
        # single VMEM buffer suffices (no double-buffer prefetch machinery).
        return pl.BlockSpec(shape, lambda i: (0, 0),
                            pipeline_mode=pl.Buffered(1))

    out = pl.pallas_call(
        encoder_vae_kernel,
        out_shape=jax.ShapeDtypeStruct((b_p, meta.out_p), jnp.float32),
        grid_spec=pltpu.PrefetchScalarGridSpec(
            num_scalar_prefetch=0,
            grid=grid,
            in_specs=[
                pl.BlockSpec((tb, meta.in_p), lambda i: (i, 0)),  # x tile
                resident((meta.in_p, meta.h_p)),                  # w1
                resident((1, meta.h_p)),                          # b1
                resident((meta.h_p, meta.h_p)),                   # w2
                resident((1, meta.h_p)),                          # b2
                resident((meta.h_p, meta.out_p)),                 # w3 (fused heads)
                resident((1, meta.out_p)),                        # b3 (fused heads)
            ],
            out_specs=pl.BlockSpec((tb, meta.out_p), lambda i: (i, 0)),
        ),
        compiler_params=pltpu.CompilerParams(
            dimension_semantics=("parallel",),
            vmem_limit_bytes=vmem_limit),
        cost_estimate=pl.CostEstimate(
            flops=int(flops), transcendentals=0,
            bytes_accessed=bytes_accessed),
    )(xp, prep.w1, prep.b1, prep.w2, prep.b2, prep.w3, prep.b3)

    # Split the fused head output and drop batch / lane padding.
    mu = out[:B, :meta.latent_dim]
    log_var = out[:B, meta.latent_dim:head_dim]
    return mu, log_var


def init_params(key, input_dim, hidden_dim, latent_dim):
    """Deterministic PyTorch-Linear-style init: U(-1/sqrt(fan_in), 1/sqrt(fan_in))."""
    def linear(k, out_dim, in_dim):
        kw, kb = jax.random.split(k)
        bound = 1.0 / jnp.sqrt(jnp.float32(in_dim))
        w = jax.random.uniform(kw, (out_dim, in_dim), jnp.float32, -bound, bound)
        b = jax.random.uniform(kb, (out_dim,), jnp.float32, -bound, bound)
        return w, b

    k1, k2, k3, k4 = jax.random.split(key, 4)
    w1, b1 = linear(k1, hidden_dim, input_dim)
    w2, b2 = linear(k2, hidden_dim, hidden_dim)
    w31, b31 = linear(k3, latent_dim, hidden_dim)
    w32, b32 = linear(k4, latent_dim, hidden_dim)
    return dict(w1=w1, b1=b1, w2=w2, b2=b2,
                w31=w31, b31=b31, w32=w32, b32=b32)


def reference_forward(x, p):
    """Pure-JAX reference matching the PyTorch module semantics."""
    h = jax.nn.relu(x @ p["w1"].T + p["b1"])
    h = jax.nn.relu(h @ p["w2"].T + p["b2"])
    mu = h @ p["w31"].T + p["b31"]
    log_var = h @ p["w32"].T + p["b32"]
    return mu, log_var


if __name__ == "__main__":
    B, input_dim, hidden_dim, latent_dim = 64, 32, 64, 16

    key = jax.random.PRNGKey(0)
    kx, kp = jax.random.split(key)
    x = jax.random.normal(kx, (B, input_dim), jnp.float32)
    params = init_params(kp, input_dim, hidden_dim, latent_dim)
    mu_ref, lv_ref = reference_forward(x, params)

    # --- f32 compute path: exact check --------------------------------------
    prep32, meta32 = prepare_params(params, compute_dtype=jnp.float32)
    jax.block_until_ready(prep32)
    mu, lv = encoder_vae_forward(x, prep32, meta=meta32)
    jax.block_until_ready((mu, lv))
    assert mu.shape == (B, latent_dim) and lv.shape == (B, latent_dim)
    assert jnp.allclose(mu, mu_ref, atol=1e-4, rtol=1e-4)
    assert jnp.allclose(lv, lv_ref, atol=1e-4, rtol=1e-4)

    # --- ragged batch (padded internally, rows sliced back out) -------------
    xr = x[:50]
    mu_r, lv_r = encoder_vae_forward(xr, prep32, meta=meta32)
    jax.block_until_ready((mu_r, lv_r))
    mu_rr, lv_rr = reference_forward(xr, params)
    assert mu_r.shape == (50, latent_dim) and lv_r.shape == (50, latent_dim)
    assert jnp.allclose(mu_r, mu_rr, atol=1e-4, rtol=1e-4)
    assert jnp.allclose(lv_r, lv_rr, atol=1e-4, rtol=1e-4)

    # --- larger batch -> grid of >=2 programs (both v7x TensorCores) --------
    xb = jax.random.normal(jax.random.PRNGKey(1), (320, input_dim), jnp.float32)
    mu_b, lv_b = encoder_vae_forward(xb, prep32, meta=meta32)
    jax.block_until_ready((mu_b, lv_b))
    mu_bb, lv_bb = reference_forward(xb, params)
    assert mu_b.shape == (320, latent_dim)
    assert jnp.allclose(mu_b, mu_bb, atol=1e-4, rtol=1e-4)
    assert jnp.allclose(lv_b, lv_bb, atol=1e-4, rtol=1e-4)

    # --- default bf16 compute path (x/weights bf16, f32 accumulation) -------
    # NOTE: x is intentionally quantized to bf16 here (source of the 5e-2 tol).
    prep16, meta16 = prepare_params(params)   # compute_dtype defaults to bf16
    jax.block_until_ready(prep16)
    mu16, lv16 = encoder_vae_forward(x, prep16, meta=meta16)
    jax.block_until_ready((mu16, lv16))
    assert mu16.shape == (B, latent_dim) and lv16.shape == (B, latent_dim)
    assert jnp.allclose(mu16, mu_ref, atol=5e-2, rtol=5e-2)
    assert jnp.allclose(lv16, lv_ref, atol=5e-2, rtol=5e-2)

    print("KERNEL_OK")
</pallas_src>

<mosaic_0001>
module attributes {stable_mosaic.version = 11 : i64} {
  func.func @encoder_vae_kernel(%arg0: i32, %arg1: memref<64x32xf32, #tpu.memory_space<vmem>>, %arg2: memref<32x128xf32, #tpu.memory_space<vmem>>, %arg3: memref<1x128xf32, #tpu.memory_space<vmem>>, %arg4: memref<128x128xf32, #tpu.memory_space<vmem>>, %arg5: memref<1x128xf32, #tpu.memory_space<vmem>>, %arg6: memref<128x128xf32, #tpu.memory_space<vmem>>, %arg7: memref<1x128xf32, #tpu.memory_space<vmem>>, %arg8: memref<64x128xf32, #tpu.memory_space<vmem>>) attributes {dimension_semantics = [#tpu.dimension_semantics<parallel>], iteration_bounds = array<i64: 1>, scalar_prefetch = 0 : i64, scratch_operands = 0 : i64, tpu.core_type = #tpu.core_type<tc>, window_params = [{transform_indices = @transform_0, window_bounds = array<i64: 64, 32>}, {pipeline_mode = #tpu.pipeline_mode<synchronous>, transform_indices = @transform_1, window_bounds = array<i64: 32, 128>}, {pipeline_mode = #tpu.pipeline_mode<synchronous>, transform_indices = @transform_2, window_bounds = array<i64: 1, 128>}, {pipeline_mode = #tpu.pipeline_mode<synchronous>, transform_indices = @transform_3, window_bounds = array<i64: 128, 128>}, {pipeline_mode = #tpu.pipeline_mode<synchronous>, transform_indices = @transform_4, window_bounds = array<i64: 1, 128>}, {pipeline_mode = #tpu.pipeline_mode<synchronous>, transform_indices = @transform_5, window_bounds = array<i64: 128, 128>}, {pipeline_mode = #tpu.pipeline_mode<synchronous>, transform_indices = @transform_6, window_bounds = array<i64: 1, 128>}, {transform_indices = @transform_7, window_bounds = array<i64: 64, 128>}]} {
    %c0 = arith.constant 0 : index
    %c0_0 = arith.constant 0 : index
    %0 = vector.load %arg1[%c0, %c0_0] : memref<64x32xf32, #tpu.memory_space<vmem>>, vector<64x32xf32>
    %c0_1 = arith.constant 0 : index
    %c0_2 = arith.constant 0 : index
    %1 = vector.load %arg2[%c0_1, %c0_2] : memref<32x128xf32, #tpu.memory_space<vmem>>, vector<32x128xf32>
    %cst = arith.constant dense<0.000000e+00> : vector<64x128xf32>
    %2 = tpu.matmul %0, %1, %cst {dimension_numbers = #tpu.dot_dimension_numbers<[1], [0], [0], [1], [0, 0, 1, 1], [], []>} : vector<64x32xf32>, vector<32x128xf32>, vector<64x128xf32> -> vector<64x128xf32>
    %c0_3 = arith.constant 0 : index
    %c0_4 = arith.constant 0 : index
    %3 = vector.load %arg3[%c0_3, %c0_4] : memref<1x128xf32, #tpu.memory_space<vmem>>, vector<1x128xf32>
    %4 = vector.broadcast %3 : vector<1x128xf32> to vector<64x128xf32>
    %5 = arith.addf %2, %4 : vector<64x128xf32>
    %cst_5 = arith.constant 0.000000e+00 : f32
    %6 = vector.broadcast %cst_5 : f32 to vector<64x128xf32>
    %7 = arith.maximumf %5, %6 : vector<64x128xf32>
    %c0_6 = arith.constant 0 : index
    %c0_7 = arith.constant 0 : index
    %8 = vector.load %arg4[%c0_6, %c0_7] : memref<128x128xf32, #tpu.memory_space<vmem>>, vector<128x128xf32>
    %cst_8 = arith.constant dense<0.000000e+00> : vector<64x128xf32>
    %9 = tpu.matmul %7, %8, %cst_8 {dimension_numbers = #tpu.dot_dimension_numbers<[1], [0], [0], [1], [0, 0, 1, 1], [], []>} : vector<64x128xf32>, vector<128x128xf32>, vector<64x128xf32> -> vector<64x128xf32>
    %c0_9 = arith.constant 0 : index
    %c0_10 = arith.constant 0 : index
    %10 = vector.load %arg5[%c0_9, %c0_10] : memref<1x128xf32, #tpu.memory_space<vmem>>, vector<1x128xf32>
    %11 = vector.broadcast %10 : vector<1x128xf32> to vector<64x128xf32>
    %12 = arith.addf %9, %11 : vector<64x128xf32>
    %cst_11 = arith.constant 0.000000e+00 : f32
    %13 = vector.broadcast %cst_11 : f32 to vector<64x128xf32>
    %14 = arith.maximumf %12, %13 : vector<64x128xf32>
    %c0_12 = arith.constant 0 : index
    %c0_13 = arith.constant 0 : index
    %15 = vector.load %arg6[%c0_12, %c0_13] : memref<128x128xf32, #tpu.memory_space<vmem>>, vector<128x128xf32>
    %cst_14 = arith.constant dense<0.000000e+00> : vector<64x128xf32>
    %16 = tpu.matmul %14, %15, %cst_14 {dimension_numbers = #tpu.dot_dimension_numbers<[1], [0], [0], [1], [0, 0, 1, 1], [], []>} : vector<64x128xf32>, vector<128x128xf32>, vector<64x128xf32> -> vector<64x128xf32>
    %c0_15 = arith.constant 0 : index
    %c0_16 = arith.constant 0 : index
    %17 = vector.load %arg7[%c0_15, %c0_16] : memref<1x128xf32, #tpu.memory_space<vmem>>, vector<1x128xf32>
    %18 = vector.broadcast %17 : vector<1x128xf32> to vector<64x128xf32>
    %19 = arith.addf %16, %18 : vector<64x128xf32>
    %c0_17 = arith.constant 0 : index
    %c0_18 = arith.constant 0 : index
    %20 = vector.load %arg8[%c0_17, %c0_18] : memref<64x128xf32, #tpu.memory_space<vmem>>, vector<64x128xf32>
    tpu.vector_store %arg8[%c0_17, %c0_18], %19 {strides = array<i32>} : memref<64x128xf32, #tpu.memory_space<vmem>>, vector<64x128xf32>,
    return
  }
  func.func @transform_0(%arg0: i32) -> (i32, i32) {
    %c0_i32 = arith.constant 0 : i32
    %c0_i32_0 = arith.constant 0 : i32
    return %arg0, %c0_i32 : i32, i32
  }
  func.func @transform_1(%arg0: i32) -> (i32, i32) {
    %c0_i32 = arith.constant 0 : i32
    %c0_i32_0 = arith.constant 0 : i32
    %c0_i32_1 = arith.constant 0 : i32
    return %c0_i32, %c0_i32_0 : i32, i32
  }
  func.func @transform_2(%arg0: i32) -> (i32, i32) {
    %c0_i32 = arith.constant 0 : i32
    %c0_i32_0 = arith.constant 0 : i32
    %c0_i32_1 = arith.constant 0 : i32
    return %c0_i32, %c0_i32_0 : i32, i32
  }
  func.func @transform_3(%arg0: i32) -> (i32, i32) {
    %c0_i32 = arith.constant 0 : i32
    %c0_i32_0 = arith.constant 0 : i32
    %c0_i32_1 = arith.constant 0 : i32
    return %c0_i32, %c0_i32_0 : i32, i32
  }
  func.func @transform_4(%arg0: i32) -> (i32, i32) {
    %c0_i32 = arith.constant 0 : i32
    %c0_i32_0 = arith.constant 0 : i32
    %c0_i32_1 = arith.constant 0 : i32
    return %c0_i32, %c0_i32_0 : i32, i32
  }
  func.func @transform_5(%arg0: i32) -> (i32, i32) {
    %c0_i32 = arith.constant 0 : i32
    %c0_i32_0 = arith.constant 0 : i32
    %c0_i32_1 = arith.constant 0 : i32
    return %c0_i32, %c0_i32_0 : i32, i32
  }
  func.func @transform_6(%arg0: i32) -> (i32, i32) {
    %c0_i32 = arith.constant 0 : i32
    %c0_i32_0 = arith.constant 0 : i32
    %c0_i32_1 = arith.constant 0 : i32
    return %c0_i32, %c0_i32_0 : i32, i32
  }
  func.func @transform_7(%arg0: i32) -> (i32, i32) {
    %c0_i32 = arith.constant 0 : i32
    %c0_i32_0 = arith.constant 0 : i32
    return %arg0, %c0_i32 : i32, i32
  }
}

</mosaic_0001>

<llo_original>
// kernel: encoder_vae_forward.1
$region0: #{encoder_vae_forward.1}
  #allocation0 [shape = 'u32[]', space=smem, size = 0x4, offset = 0x4, fixed_abs, tag = 'smem constant byte address 0x4 - core index']
  #allocation1 [shape = 'u32[72,128]{1,0:T(1,128)}', space=vmem, size = 0x9000, scoped, tag = 'internal scratch']
  %s0 = inlined_call_operand.vmem [shape: f32[64,32], index: 0, kind: input, shape index: {}]
  %s1 = inlined_call_operand.vmem [shape: f32[32,128], index: 1, kind: input, shape index: {}]
  %s2 = inlined_call_operand.vmem [shape: f32[1,128], index: 2, kind: input, shape index: {}]
  %s3 = inlined_call_operand.hbm [shape: f32[128,128], index: 3, kind: input, shape index: {}]
  %s4 = inlined_call_operand.vmem [shape: f32[1,128], index: 4, kind: input, shape index: {}]
  %s5 = inlined_call_operand.hbm [shape: f32[128,128], index: 5, kind: input, shape index: {}]
  %s6 = inlined_call_operand.vmem [shape: f32[1,128], index: 6, kind: input, shape index: {}]
  %s7 = inlined_call_operand.vmem [shape: f32[64,128], index: 7, kind: output, shape index: {}]
  %s8 = sld [smem:[#allocation0]]
  $region46: #{encoder_vae_forward.1} parent=0
    _
  %s10 = ssub.s32 1, %s8
  %s11 = scalar_select 0, %s10, %s8
  $region1: #{encoder_vae_forward.1} parent=0
    #allocation2 [shape = 'u8[65536]{0}', space=vmem, size = 0x10000, scoped, tag = 'input window, operand 3, single buffered']
    #allocation3 [shape = 's32[1]{0}', space=sflag, size = 0x4, scoped, tag = 'scoped memory for encoder_vae_forward.1']
    #allocation4 [shape = 'u8[65536]{0}', space=vmem, size = 0x10000, scoped, tag = 'input window, operand 5, single buffered']
    #allocation5 [shape = 's32[1]{0}', space=sflag, size = 0x4, scoped, tag = 'scoped memory for encoder_vae_forward.1']
    %12 = vsyncpa [#allocation3], 0
    %13 = vsyncpa [#allocation5], 0
    // Predicated region
    $region2: #{encoder_vae_forward.1} parent=1 // pred_check
      _
    $region3: #{encoder_vae_forward.1} parent=1 // pred_check_branch
      %15 = sbr.rel (0) target = $region5
    $region4: #{encoder_vae_forward.1} parent=1 // pred_region
      _
    $region5: #{encoder_vae_forward.1} parent=1 // pred_fallthru
      _
    // Predicated region
    $region6: #{encoder_vae_forward.1} parent=1 // pred_check
      _
    $region7: #{encoder_vae_forward.1} parent=1 // pred_check_branch
      %17 = sbr.rel (0) target = $region9
    $region8: #{encoder_vae_forward.1} parent=1 // pred_region
      _
    $region9: #{encoder_vae_forward.1} parent=1 // pred_fallthru
      _
    // Predicated region
    $region10: #{encoder_vae_forward.1} parent=1 // pred_check
      _
    $region11: #{encoder_vae_forward.1} parent=1 // pred_check_branch
      %19 = sbr.rel (0) target = $region13
    $region12: #{encoder_vae_forward.1} parent=1 // pred_region
      _
    $region13: #{encoder_vae_forward.1} parent=1 // pred_fallthru
      _
    // Predicated region
    $region14: #{encoder_vae_forward.1} parent=1 // pred_check
      _
    $region15: #{encoder_vae_forward.1} parent=1 // pred_check_branch
      %21 = sbr.rel (0) target = $region17
    $region16: #{encoder_vae_forward.1} parent=1 // pred_region
      %23 = vsyncadd [#allocation3], 0
      %s24 = sshll.u32 %s3, 4
      %s25 = int_to_ptr.hbm [resolvable:$true] %s24
      %s26 = sshll.u32 [#allocation2], 4
      %s27 = int_to_ptr.vmem [resolvable:$true] %s26
      %32 = dma.hbm_to_vmem [thread:$0]  %s25, 2048, %s27, [#allocation3], 128, 128, 8
    $region17: #{encoder_vae_forward.1} parent=1 // pred_fallthru
      _
    // Predicated region
    $region18: #{encoder_vae_forward.1} parent=1 // pred_check
      _
    $region19: #{encoder_vae_forward.1} parent=1 // pred_check_branch
      %34 = sbr.rel (0) target = $region21
    $region20: #{encoder_vae_forward.1} parent=1 // pred_region
      _
    $region21: #{encoder_vae_forward.1} parent=1 // pred_fallthru
      _
    // Predicated region
    $region22: #{encoder_vae_forward.1} parent=1 // pred_check
      _
    $region23: #{encoder_vae_forward.1} parent=1 // pred_check_branch
      %36 = sbr.rel (0) target = $region25
    $region24: #{encoder_vae_forward.1} parent=1 // pred_region
      %38 = vsyncadd [#allocation5], 0
      %s39 = sshll.u32 %s5, 4
      %s40 = int_to_ptr.hbm [resolvable:$true] %s39
      %s41 = sshll.u32 [#allocation4], 4
      %s42 = int_to_ptr.vmem [resolvable:$true] %s41
      %47 = dma.hbm_to_vmem [thread:$0]  %s40, 2048, %s42, [#allocation5], 128, 128, 8
    $region25: #{encoder_vae_forward.1} parent=1 // pred_fallthru
      _
    // Predicated region
    $region26: #{encoder_vae_forward.1} parent=1 // pred_check
      _
    $region27: #{encoder_vae_forward.1} parent=1 // pred_check_branch
      %49 = sbr.rel (0) target = $region29
    $region28: #{encoder_vae_forward.1} parent=1 // pred_region
      _
    $region29: #{encoder_vae_forward.1} parent=1 // pred_fallthru
      _
    // Predicated region
    $region30: #{encoder_vae_forward.1} parent=1 // pred_check
      _
    $region31: #{encoder_vae_forward.1} parent=1 // pred_check_branch
      %51 = sbr.rel (0) target = $region33
    $region32: #{encoder_vae_forward.1} parent=1 // pred_region
      %53 = dma.done [#allocation3], 2048
    $region33: #{encoder_vae_forward.1} parent=1 // pred_fallthru
      _
    // Predicated region
    $region34: #{encoder_vae_forward.1} parent=1 // pred_check
      _
    $region35: #{encoder_vae_forward.1} parent=1 // pred_check_branch
      %55 = sbr.rel (0) target = $region37
    $region36: #{encoder_vae_forward.1} parent=1 // pred_region
      %57 = dma.done [#allocation5], 2048
    $region37: #{encoder_vae_forward.1} parent=1 // pred_fallthru
      _
    %v58 = vld [vmem:[%s0] sm:$0xff]
    %v59 = vld [vmem:[%s0 + $0x8] sm:$0xff]
    %v60 = vld [vmem:[%s0 + $0x10] sm:$0xff]
    %v61 = vld [vmem:[%s0 + $0x18] sm:$0xff]
    %v62 = vld [vmem:[%s0 + $0x20] sm:$0xff]
    %v63 = vld [vmem:[%s0 + $0x28] sm:$0xff]
    %v64 = vld [vmem:[%s0 + $0x30] sm:$0xff]
    %v65 = vld [vmem:[%s0 + $0x38] sm:$0xff]
    %v66 = vld [vmem:[%s1] sm:$0xff]
    %v67 = vld [vmem:[%s1 + $0x8] sm:$0xff]
    %v68 = vld [vmem:[%s1 + $0x10] sm:$0xff]
    %v69 = vld [vmem:[%s1 + $0x18] sm:$0xff]
    %v70 = vld [vmem:[%s2] sm:$0x1]
    %v72 = vperm.slane %v70, 0
    %vm74 = vcmask 261120
    %v76 = vsel %vm74, %v58, 0
    %v79 = vsel %vm74, %v59, 0
    %v82 = vsel %vm74, %v60, 0
    %v85 = vsel %vm74, %v61, 0
    %v88 = vsel %vm74, %v62, 0
    %v91 = vsel %vm74, %v63, 0
    %v94 = vsel %vm74, %v64, 0
    %v97 = vsel %vm74, %v65, 0
    %99 = vmatpush.msra.mxu0 0.0
    %100 = vmatpush.msra.mxu0 0.0
    %101 = vmatpush.msra.mxu0 0.0
    %102 = vmatpush.msra.mxu0 0.0
    %103 = vmatpush.msra.mxu0 0.0
    %104 = vmatpush.msra.mxu0 0.0
    %105 = vmatpush.msra.mxu0 0.0
    %106 = vmatpush.msra.mxu0 0.0
    %107 = vmatpush.msra.mxu0 0.0
    %108 = vmatpush.msra.mxu0 0.0
    %109 = vmatpush.msra.mxu0 0.0
    %110 = vmatpush.msra.mxu0 0.0
    %111 = vmatpush.msra.mxu0 %v69
    %112 = vmatpush.msra.mxu0 %v68
    %113 = vmatpush.msra.mxu0 %v67
    %114 = vmatpush.msra.mxu0 %v66
    %115 = vmatmul.f32.gmra.mxu0 %v76
    %v116 = vpop.f32.mrf.mxu0
    %v117 = vadd.f32 %v72, %v116
    %118 = vmatmul.f32.gmra.mxu0 %v79
    %v119 = vpop.f32.mrf.mxu0
    %v120 = vadd.f32 %v72, %v119
    %121 = vmatmul.f32.gmra.mxu0 %v82
    %v122 = vpop.f32.mrf.mxu0
    %v123 = vadd.f32 %v72, %v122
    %124 = vmatmul.f32.gmra.mxu0 %v85
    %v125 = vpop.f32.mrf.mxu0
    %v126 = vadd.f32 %v72, %v125
    %127 = vmatmul.f32.gmra.mxu0 %v88
    %v128 = vpop.f32.mrf.mxu0
    %v129 = vadd.f32 %v72, %v128
    %130 = vmatmul.f32.gmra.mxu0 %v91
    %v131 = vpop.f32.mrf.mxu0
    %v132 = vadd.f32 %v72, %v131
    %133 = vmatmul.f32.gmra.mxu0 %v94
    %v134 = vpop.f32.mrf.mxu0
    %v135 = vadd.f32 %v72, %v134
    %136 = vmatmul.f32.gmra.mxu0 %v97
    %v137 = vpop.f32.mrf.mxu0
    %v138 = vadd.f32 %v72, %v137
    %139 = vdwg.mxu0
    %v140 = vmax.f32 %v117, 0.0
    %v141 = vmax.f32 %v120, 0.0
    %v142 = vmax.f32 %v123, 0.0
    %v143 = vmax.f32 %v126, 0.0
    %v144 = vmax.f32 %v129, 0.0
    %v145 = vmax.f32 %v132, 0.0
    %v146 = vmax.f32 %v135, 0.0
    %v147 = vmax.f32 %v138, 0.0
    %v148 = vld [vmem:[#allocation2] sm:$0xff]
    %v149 = vld [vmem:[#allocation2 + $0x8] sm:$0xff]
    %v150 = vld [vmem:[#allocation2 + $0x10] sm:$0xff]
    %v151 = vld [vmem:[#allocation2 + $0x18] sm:$0xff]
    %v152 = vld [vmem:[#allocation2 + $0x20] sm:$0xff]
    %v153 = vld [vmem:[#allocation2 + $0x28] sm:$0xff]
    %v154 = vld [vmem:[#allocation2 + $0x30] sm:$0xff]
    %v155 = vld [vmem:[#allocation2 + $0x38] sm:$0xff]
    %v156 = vld [vmem:[#allocation2 + $0x40] sm:$0xff]
    %v157 = vld [vmem:[#allocation2 + $0x48] sm:$0xff]
    %v158 = vld [vmem:[#allocation2 + $0x50] sm:$0xff]
    %v159 = vld [vmem:[#allocation2 + $0x58] sm:$0xff]
    %v160 = vld [vmem:[#allocation2 + $0x60] sm:$0xff]
    %v161 = vld [vmem:[#allocation2 + $0x68] sm:$0xff]
    %v162 = vld [vmem:[#allocation2 + $0x70] sm:$0xff]
    %v163 = vld [vmem:[#allocation2 + $0x78] sm:$0xff]
    %v164 = vld [vmem:[%s4] sm:$0x1]
    %v166 = vperm.slane %v164, 0
    %168 = vmatpush.msra.mxu0 %v163
    %169 = vmatpush.msra.mxu0 %v162
    %170 = vmatpush.msra.mxu0 %v161
    %171 = vmatpush.msra.mxu0 %v160
    %172 = vmatpush.msra.mxu0 %v159
    %173 = vmatpush.msra.mxu0 %v158
    %174 = vmatpush.msra.mxu0 %v157
    %175 = vmatpush.msra.mxu0 %v156
    %176 = vmatpush.msra.mxu0 %v155
    %177 = vmatpush.msra.mxu0 %v154
    %178 = vmatpush.msra.mxu0 %v153
    %179 = vmatpush.msra.mxu0 %v152
    %180 = vmatpush.msra.mxu0 %v151
    %181 = vmatpush.msra.mxu0 %v150
    %182 = vmatpush.msra.mxu0 %v149
    %183 = vmatpush.msra.mxu0 %v148
    %184 = vmatmul.f32.gmra.mxu0 %v140
    %v185 = vpop.f32.mrf.mxu0
    %v186 = vadd.f32 %v166, %v185
    %187 = vmatmul.f32.gmra.mxu0 %v141
    %v188 = vpop.f32.mrf.mxu0
    %v189 = vadd.f32 %v166, %v188
    %190 = vmatmul.f32.gmra.mxu0 %v142
    %v191 = vpop.f32.mrf.mxu0
    %v192 = vadd.f32 %v166, %v191
    %193 = vmatmul.f32.gmra.mxu0 %v143
    %v194 = vpop.f32.mrf.mxu0
    %v195 = vadd.f32 %v166, %v194
    %196 = vmatmul.f32.gmra.mxu0 %v144
    %v197 = vpop.f32.mrf.mxu0
    %v198 = vadd.f32 %v166, %v197
    %199 = vmatmul.f32.gmra.mxu0 %v145
    %v200 = vpop.f32.mrf.mxu0
    %v201 = vadd.f32 %v166, %v200
    %202 = vmatmul.f32.gmra.mxu0 %v146
    %v203 = vpop.f32.mrf.mxu0
    %v204 = vadd.f32 %v166, %v203
    %205 = vmatmul.f32.gmra.mxu0 %v147
    %v206 = vpop.f32.mrf.mxu0
    %v207 = vadd.f32 %v166, %v206
    %208 = vdwg.mxu0
    %v209 = vmax.f32 %v186, 0.0
    %v210 = vmax.f32 %v189, 0.0
    %v211 = vmax.f32 %v192, 0.0
    %v212 = vmax.f32 %v195, 0.0
    %v213 = vmax.f32 %v198, 0.0
    %v214 = vmax.f32 %v201, 0.0
    %v215 = vmax.f32 %v204, 0.0
    %v216 = vmax.f32 %v207, 0.0
    %v217 = vld [vmem:[#allocation4] sm:$0xff]
    %v218 = vld [vmem:[#allocation4 + $0x8] sm:$0xff]
    %v219 = vld [vmem:[#allocation4 + $0x10] sm:$0xff]
    %v220 = vld [vmem:[#allocation4 + $0x18] sm:$0xff]
    %v221 = vld [vmem:[#allocation4 + $0x20] sm:$0xff]
    %v222 = vld [vmem:[#allocation4 + $0x28] sm:$0xff]
    %v223 = vld [vmem:[#allocation4 + $0x30] sm:$0xff]
    %v224 = vld [vmem:[#allocation4 + $0x38] sm:$0xff]
    %v225 = vld [vmem:[#allocation4 + $0x40] sm:$0xff]
    %v226 = vld [vmem:[#allocation4 + $0x48] sm:$0xff]
    %v227 = vld [vmem:[#allocation4 + $0x50] sm:$0xff]
    %v228 = vld [vmem:[#allocation4 + $0x58] sm:$0xff]
    %v229 = vld [vmem:[#allocation4 + $0x60] sm:$0xff]
    %v230 = vld [vmem:[#allocation4 + $0x68] sm:$0xff]
    %v231 = vld [vmem:[#allocation4 + $0x70] sm:$0xff]
    %v232 = vld [vmem:[#allocation4 + $0x78] sm:$0xff]
    %v233 = vld [vmem:[%s6] sm:$0x1]
    %v235 = vperm.slane %v233, 0
    %237 = vmatpush.msra.mxu0 %v232
    %238 = vmatpush.msra.mxu0 %v231
    %239 = vmatpush.msra.mxu0 %v230
    %240 = vmatpush.msra.mxu0 %v229
    %241 = vmatpush.msra.mxu0 %v228
    %242 = vmatpush.msra.mxu0 %v227
    %243 = vmatpush.msra.mxu0 %v226
    %244 = vmatpush.msra.mxu0 %v225
    %245 = vmatpush.msra.mxu0 %v224
    %246 = vmatpush.msra.mxu0 %v223
    %247 = vmatpush.msra.mxu0 %v222
    %248 = vmatpush.msra.mxu0 %v221
    %249 = vmatpush.msra.mxu0 %v220
    %250 = vmatpush.msra.mxu0 %v219
    %251 = vmatpush.msra.mxu0 %v218
    %252 = vmatpush.msra.mxu0 %v217
    %253 = vmatmul.f32.gmra.mxu0 %v209
    %v254 = vpop.f32.mrf.mxu0
    %v255 = vadd.f32 %v235, %v254
    %256 = vmatmul.f32.gmra.mxu0 %v210
    %v257 = vpop.f32.mrf.mxu0
    %v258 = vadd.f32 %v235, %v257
    %259 = vmatmul.f32.gmra.mxu0 %v211
    %v260 = vpop.f32.mrf.mxu0
    %v261 = vadd.f32 %v235, %v260
    %262 = vmatmul.f32.gmra.mxu0 %v212
    %v263 = vpop.f32.mrf.mxu0
    %v264 = vadd.f32 %v235, %v263
    %265 = vmatmul.f32.gmra.mxu0 %v213
    %v266 = vpop.f32.mrf.mxu0
    %v267 = vadd.f32 %v235, %v266
    %268 = vmatmul.f32.gmra.mxu0 %v214
    %v269 = vpop.f32.mrf.mxu0
    %v270 = vadd.f32 %v235, %v269
    %271 = vmatmul.f32.gmra.mxu0 %v215
    %v272 = vpop.f32.mrf.mxu0
    %v273 = vadd.f32 %v235, %v272
    %274 = vmatmul.f32.gmra.mxu0 %v216
    %v275 = vpop.f32.mrf.mxu0
    %v276 = vadd.f32 %v235, %v275
    %277 = vdwg.mxu0
    %278 = vst [vmem:[%s7] sm:$0xff] %v255
    %279 = vst [vmem:[%s7 + $0x8] sm:$0xff] %v258
    %280 = vst [vmem:[%s7 + $0x10] sm:$0xff] %v261
    %281 = vst [vmem:[%s7 + $0x18] sm:$0xff] %v264
    %282 = vst [vmem:[%s7 + $0x20] sm:$0xff] %v267
    %283 = vst [vmem:[%s7 + $0x28] sm:$0xff] %v270
    %284 = vst [vmem:[%s7 + $0x30] sm:$0xff] %v273
    %285 = vst [vmem:[%s7 + $0x38] sm:$0xff] %v276
    // Predicated region
    $region38: #{encoder_vae_forward.1} parent=1 // pred_check
      _
    $region39: #{encoder_vae_forward.1} parent=1 // pred_check_branch
      %287 = sbr.rel (0) target = $region41
    $region40: #{encoder_vae_forward.1} parent=1 // pred_region
      _
    $region41: #{encoder_vae_forward.1} parent=1 // pred_fallthru
      _
    // Predicated region
    $region42: #{encoder_vae_forward.1} parent=1 // pred_check
      _
    $region43: #{encoder_vae_forward.1} parent=1 // pred_check_branch
      %289 = sbr.rel (0) target = $region45
    $region44: #{encoder_vae_forward.1} parent=1 // pred_region
      _
    $region45: #{encoder_vae_forward.1} parent=1 // pred_fallthru
      _
    %290 = vsyncpa [#allocation3], 1
    %291 = vsyncpa [#allocation5], 1

</llo_original>
